<compile_context>
chip_gen: v7x
topology: tpu7x:2x2x1
jax: 0.10.0
libtpu: 0.0.40
codegen_flags: <defaults>
</compile_context>

<pallas_src>
import jax
import jax.numpy as jnp
from jax import lax
from jax.experimental import pallas as pl
from jax.experimental.pallas import tpu as pltpu


def _cdiv(a, b):
    return (a + b - 1) // b


def _round_up(a, b):
    return _cdiv(a, b) * b


def _hardware_params():
    """Returns (num_groups, tile_budget_bytes, vmem_limit_bytes) per TPU gen."""
    vmem_cap = None
    try:
        vmem_cap = int(pltpu.get_tpu_info().vmem_capacity_bytes)
    except Exception:
        vmem_cap = None

    kind = ""
    try:
        kind = (getattr(jax.devices()[0], "device_kind", "") or "").lower()
    except Exception:
        pass
    is_v7 = "v7" in kind

    if vmem_cap is None:
        vmem_cap = (64 if is_v7 else 128) * 1024 * 1024

    # v7x: 2 TensorCores/chip and 64 MiB VMEM per TC.  v5e/v6e: 1 TC, 128 MiB.
    num_groups = 2 if (is_v7 or vmem_cap <= 64 * 1024 * 1024) else 1
    tile_budget = (vmem_cap * 3) // 8      # ~48 MiB on 128 MiB parts, ~24 MiB on v7x
    vmem_limit = (vmem_cap * 3) // 4       # ~96 MiB on 128 MiB parts, ~48 MiB on v7x
    return num_groups, tile_budget, vmem_limit


def _make_kernel(n_rows, tile_n, tiles_per_group):
    """Kernel closure over static row count / tiling (no scalar prefetch needed)."""

    def kernel(logits_ref, labels_ref, out_ref, acc_ref):
        g = pl.program_id(0)
        t = pl.program_id(1)

        @pl.when(t == 0)
        def _():
            acc_ref[...] = jnp.zeros_like(acc_ref)

        # Logical (unclamped) row range of this tile.  Rows >= n_rows (ragged
        # tail / phantom tiles re-reading the last valid block) are masked so
        # they contribute exactly zero.
        row_start = (g * tiles_per_group + t) * tile_n
        row_ids = lax.broadcasted_iota(jnp.int32, (tile_n, 1), 0) + row_start
        valid = row_ids < n_rows                                     # (tile_n, 1)

        # Spec: logits.float(); labels.float().  Masked rows -> 0 keeps the
        # exp/log path finite even if the OOB part of an edge block is garbage.
        # TODO(synk): optional bf16 elementwise path (f32 reductions) for
        # bf16 inputs on v6e/v7x to halve temporary bytes.
        x = jnp.where(valid, logits_ref[...].astype(jnp.float32), 0.0)
        y = jnp.where(valid, labels_ref[...].astype(jnp.float32), 0.0)

        # row_loss = -sum(y * (x - m - lse)) = (m + lse) * sum(y) - sum(y * x)
        m = jnp.max(x, axis=-1, keepdims=True)                        # (tile_n, 1)
        lse = jnp.log(jnp.sum(jnp.exp(x - m), axis=-1, keepdims=True))
        sum_y = jnp.sum(y, axis=-1, keepdims=True)                    # (tile_n, 1)
        dot_yx = jnp.sum(y * x, axis=-1, keepdims=True)               # (tile_n, 1)
        acc_ref[...] += (m + lse) * sum_y - dot_yx

        @pl.when(t == pl.num_programs(1) - 1)
        def _():
            # Collapse to a scalar only once per group; store lane-dense.
            total = jnp.sum(acc_ref[...])
            out_ref[...] = jnp.full(out_ref.shape, total, dtype=jnp.float32)

    return kernel


def dense_cross_entropy(logits, labels, *, tile_n=None, num_groups=None):
    """Mean over rows of -sum(labels * log_softmax(logits, -1), -1)."""
    assert logits.shape == labels.shape
    c = logits.shape[-1]
    logits2 = logits.reshape(-1, c)
    labels2 = labels.reshape(-1, c)
    n = logits2.shape[0]

    auto_groups, tile_budget, vmem_limit = _hardware_params()
    if num_groups is None:
        num_groups = auto_groups

    itemsize = jnp.dtype(logits2.dtype).itemsize
    row_align = max(8, 32 // max(itemsize, 1))      # 8 rows f32, 16 rows bf16

    if tile_n is None:
        # VMEM accounting (dtype- and lane-padding-aware):
        #   * class dim padded to a multiple of 128 lanes,
        #   * 2 inputs x 2 pipeline buffers in the input dtype,
        #   * ~5 live f32 (tile_n, C) temporaries,
        #   * lane-padded (tile_n, 128) f32 accumulator.
        c_pad = _round_up(c, 128)
        bytes_per_row = 2 * 2 * c_pad * itemsize + 5 * c_pad * 4 + 128 * 4
        tile_n = (tile_budget // bytes_per_row // row_align) * row_align
        tile_n = min(max(tile_n, row_align), 8192)
        # TODO(synk): for vocab-scale C where even `row_align` rows exceed the
        # budget, add an inner class-chunk grid axis with an online
        # log-sum-exp instead of holding a full (tile_n, C) block resident.

    tile_n = max(row_align, (tile_n // row_align) * row_align)
    tile_n = min(tile_n, _round_up(n, row_align))

    total_tiles = _cdiv(n, tile_n)
    num_groups = max(1, min(total_tiles, num_groups))
    tiles_per_group = _cdiv(total_tiles, num_groups)
    last_tile = total_tiles - 1

    # Ragged tail handled in-kernel (row masking); clamp phantom tiles of the
    # last group onto the final valid block (their rows are fully masked).
    def in_map(g, t):
        return (jnp.minimum(g * tiles_per_group + t, last_tile), 0)

    kernel = _make_kernel(n, tile_n, tiles_per_group)

    partials = pl.pallas_call(
        kernel,
        out_shape=jax.ShapeDtypeStruct((num_groups, 8, 128), jnp.float32),
        grid_spec=pltpu.PrefetchScalarGridSpec(
            num_scalar_prefetch=0,
            grid=(num_groups, tiles_per_group),
            in_specs=[
                pl.BlockSpec((tile_n, c), in_map),
                pl.BlockSpec((tile_n, c), in_map),
            ],
            out_specs=pl.BlockSpec((1, 8, 128), lambda g, t: (g, 0, 0)),
            scratch_shapes=[pltpu.VMEM((tile_n, 1), jnp.float32)],
        ),
        compiler_params=pltpu.CompilerParams(
            dimension_semantics=("parallel", "arbitrary"),
            vmem_limit_bytes=vmem_limit,
        ),
    )(logits2, labels2)

    # Tiny cross-group reduction + mean, in plain XLA.
    return jnp.sum(partials[:, 0, 0]) / jnp.float32(n)


def _reference(logits, labels):
    logits = logits.astype(jnp.float32)
    labels = labels.astype(jnp.float32)
    logprobs = jax.nn.log_softmax(logits, axis=-1)
    return jnp.mean(jnp.sum(-labels * logprobs, axis=-1))


if __name__ == "__main__":
    key = jax.random.PRNGKey(0)
    k1, k2, k3, k4 = jax.random.split(key, 4)

    # Case 1: aligned small shape (16 rows, 32 classes), soft labels.
    N, C = 16, 32
    logits = jax.random.normal(k1, (N, C), dtype=jnp.float32)
    labels = jax.nn.softmax(jax.random.normal(k2, (N, C), dtype=jnp.float32), axis=-1)

    loss = jax.block_until_ready(dense_cross_entropy(logits, labels))
    ref = _reference(logits, labels)
    assert jnp.allclose(loss, ref, atol=1e-5, rtol=1e-5), (loss, ref)

    # Case 2: ragged row count (13 rows) with a small forced tile to exercise
    # the in-kernel tail masking / clamped index_map path (no padding copies).
    N2, C2 = 13, 32
    logits2 = jax.random.normal(k3, (N2, C2), dtype=jnp.float32)
    labels2 = jax.nn.softmax(jax.random.normal(k4, (N2, C2), dtype=jnp.float32), axis=-1)

    loss2 = jax.block_until_ready(dense_cross_entropy(logits2, labels2, tile_n=8))
    ref2 = _reference(logits2, labels2)
    assert jnp.allclose(loss2, ref2, atol=1e-5, rtol=1e-5), (loss2, ref2)

    print("KERNEL_OK")
</pallas_src>

<mosaic_0001>
module attributes {stable_mosaic.version = 11 : i64} {
  func.func @kernel(%arg0: i32, %arg1: i32, %arg2: memref<16x32xf32, #tpu.memory_space<vmem>>, %arg3: memref<16x32xf32, #tpu.memory_space<vmem>>, %arg4: memref<1x8x128xf32, #tpu.memory_space<vmem>>, %arg5: memref<16x1xf32, #tpu.memory_space<vmem>>) attributes {dimension_semantics = [#tpu.dimension_semantics<parallel>, #tpu.dimension_semantics<arbitrary>], iteration_bounds = array<i64: 1, 1>, scalar_prefetch = 0 : i64, scratch_operands = 1 : i64, tpu.core_type = #tpu.core_type<tc>, window_params = [{transform_indices = @transform_0, window_bounds = array<i64: 16, 32>}, {transform_indices = @transform_1, window_bounds = array<i64: 16, 32>}, {transform_indices = @transform_2, window_bounds = array<i64: 1, 8, 128>}]} {
    %c0_i32 = arith.constant 0 : i32
    %0 = arith.cmpi eq, %arg1, %c0_i32 : i32
    %1 = arith.extui %0 : i1 to i32
    %c0_i32_0 = arith.constant 0 : i32
    %2 = arith.cmpi ne, %1, %c0_i32_0 : i32
    scf.if %2 {
      %cst_16 = arith.constant 0.000000e+00 : f32
      %43 = vector.broadcast %cst_16 : f32 to vector<16x1xf32>
      %c0_17 = arith.constant 0 : index
      %c0_18 = arith.constant 0 : index
      %44 = vector.load %arg5[%c0_17, %c0_18] : memref<16x1xf32, #tpu.memory_space<vmem>>, vector<16x1xf32>
      tpu.vector_store %arg5[%c0_17, %c0_18], %43 {strides = array<i32>} : memref<16x1xf32, #tpu.memory_space<vmem>>, vector<16x1xf32>,
    } else {
    }
    %c1_i32 = arith.constant 1 : i32
    %3 = arith.muli %arg0, %c1_i32 : i32
    %4 = arith.addi %3, %arg1 : i32
    %c16_i32 = arith.constant 16 : i32
    %5 = arith.muli %4, %c16_i32 : i32
    %6 = tpu.iota {dimensions = array<i32: 0>} : vector<16x1xi32>
    %7 = vector.broadcast %5 : i32 to vector<16x1xi32>
    %8 = arith.addi %6, %7 : vector<16x1xi32>
    %c16_i32_1 = arith.constant 16 : i32
    %9 = vector.broadcast %c16_i32_1 : i32 to vector<16x1xi32>
    %10 = arith.cmpi slt, %8, %9 : vector<16x1xi32>
    %c0 = arith.constant 0 : index
    %c0_2 = arith.constant 0 : index
    %11 = vector.load %arg2[%c0, %c0_2] : memref<16x32xf32, #tpu.memory_space<vmem>>, vector<16x32xf32>
    %cst = arith.constant 0.000000e+00 : f32
    %12 = vector.shape_cast %10 : vector<16x1xi1> to vector<16x1xi1>
    %13 = vector.broadcast %12 : vector<16x1xi1> to vector<16x32xi1>
    %14 = vector.broadcast %cst : f32 to vector<16x32xf32>
    %15 = arith.select %13, %11, %14 : vector<16x32xi1>, vector<16x32xf32>
    %c0_3 = arith.constant 0 : index
    %c0_4 = arith.constant 0 : index
    %16 = vector.load %arg3[%c0_3, %c0_4] : memref<16x32xf32, #tpu.memory_space<vmem>>, vector<16x32xf32>
    %cst_5 = arith.constant 0.000000e+00 : f32
    %17 = vector.shape_cast %10 : vector<16x1xi1> to vector<16x1xi1>
    %18 = vector.broadcast %17 : vector<16x1xi1> to vector<16x32xi1>
    %19 = vector.broadcast %cst_5 : f32 to vector<16x32xf32>
    %20 = arith.select %18, %16, %19 : vector<16x32xi1>, vector<16x32xf32>
    %cst_6 = arith.constant dense<0xFF800000> : vector<16xf32>
    %21 = vector.multi_reduction <maximumf>, %15, %cst_6 [1] : vector<16x32xf32> to vector<16xf32>
    %22 = vector.shape_cast %21 : vector<16xf32> to vector<16x1xf32>
    %23 = vector.broadcast %22 : vector<16x1xf32> to vector<16x32xf32>
    %24 = arith.subf %15, %23 : vector<16x32xf32>
    %25 = math.exp %24 : vector<16x32xf32>
    %cst_7 = arith.constant dense<0.000000e+00> : vector<16xf32>
    %26 = vector.multi_reduction <add>, %25, %cst_7 [1] : vector<16x32xf32> to vector<16xf32>
    %27 = vector.shape_cast %26 : vector<16xf32> to vector<16x1xf32>
    %28 = math.log %27 : vector<16x1xf32>
    %cst_8 = arith.constant dense<0.000000e+00> : vector<16xf32>
    %29 = vector.multi_reduction <add>, %20, %cst_8 [1] : vector<16x32xf32> to vector<16xf32>
    %30 = vector.shape_cast %29 : vector<16xf32> to vector<16x1xf32>
    %31 = arith.mulf %20, %15 : vector<16x32xf32>
    %cst_9 = arith.constant dense<0.000000e+00> : vector<16xf32>
    %32 = vector.multi_reduction <add>, %31, %cst_9 [1] : vector<16x32xf32> to vector<16xf32>
    %33 = vector.shape_cast %32 : vector<16xf32> to vector<16x1xf32>
    %c0_10 = arith.constant 0 : index
    %c0_11 = arith.constant 0 : index
    %34 = vector.load %arg5[%c0_10, %c0_11] : memref<16x1xf32, #tpu.memory_space<vmem>>, vector<16x1xf32>
    %35 = arith.addf %22, %28 : vector<16x1xf32>
    %36 = arith.mulf %35, %30 : vector<16x1xf32>
    %37 = arith.subf %36, %33 : vector<16x1xf32>
    %38 = arith.addf %34, %37 : vector<16x1xf32>
    %c0_12 = arith.constant 0 : index
    %c0_13 = arith.constant 0 : index
    %39 = vector.load %arg5[%c0_12, %c0_13] : memref<16x1xf32, #tpu.memory_space<vmem>>, vector<16x1xf32>
    tpu.vector_store %arg5[%c0_12, %c0_13], %38 {strides = array<i32>} : memref<16x1xf32, #tpu.memory_space<vmem>>, vector<16x1xf32>,
    %c0_i32_14 = arith.constant 0 : i32
    %40 = arith.cmpi eq, %arg1, %c0_i32_14 : i32
    %41 = arith.extui %40 : i1 to i32
    %c0_i32_15 = arith.constant 0 : i32
    %42 = arith.cmpi ne, %41, %c0_i32_15 : i32
    scf.if %42 {
      %c0_16 = arith.constant 0 : index
      %c0_17 = arith.constant 0 : index
      %43 = vector.load %arg5[%c0_16, %c0_17] : memref<16x1xf32, #tpu.memory_space<vmem>>, vector<16x1xf32>
      %44 = vector.shape_cast %43 : vector<16x1xf32> to vector<1x16x1xf32>
      %cst_18 = arith.constant dense<0.000000e+00> : vector<1xf32>
      %45 = vector.multi_reduction <add>, %44, %cst_18 [1, 2] : vector<1x16x1xf32> to vector<1xf32>
      %46 = vector.shape_cast %45 : vector<1xf32> to vector<1x1x1xf32>
      %47 = vector.extract %46[0, 0, 0] : f32 from vector<1x1x1xf32>
      %48 = vector.broadcast %47 : f32 to vector<1x8x128xf32>
      %c0_19 = arith.constant 0 : index
      %c0_20 = arith.constant 0 : index
      %c0_21 = arith.constant 0 : index
      %49 = vector.load %arg4[%c0_19, %c0_20, %c0_21] : memref<1x8x128xf32, #tpu.memory_space<vmem>>, vector<1x8x128xf32>
      tpu.vector_store %arg4[%c0_19, %c0_20, %c0_21], %48 {strides = array<i32>} : memref<1x8x128xf32, #tpu.memory_space<vmem>>, vector<1x8x128xf32>,
    } else {
    }
    return
  }
  func.func @transform_0(%arg0: i32, %arg1: i32) -> (i32, i32) {
    %c1_i32 = arith.constant 1 : i32
    %0 = arith.muli %arg0, %c1_i32 : i32
    %1 = arith.addi %0, %arg1 : i32
    %c0_i32 = arith.constant 0 : i32
    %2 = arith.minsi %1, %c0_i32 : i32
    %c0_i32_0 = arith.constant 0 : i32
    %c0_i32_1 = arith.constant 0 : i32
    return %2, %c0_i32_0 : i32, i32
  }
  func.func @transform_1(%arg0: i32, %arg1: i32) -> (i32, i32) {
    %c1_i32 = arith.constant 1 : i32
    %0 = arith.muli %arg0, %c1_i32 : i32
    %1 = arith.addi %0, %arg1 : i32
    %c0_i32 = arith.constant 0 : i32
    %2 = arith.minsi %1, %c0_i32 : i32
    %c0_i32_0 = arith.constant 0 : i32
    %c0_i32_1 = arith.constant 0 : i32
    return %2, %c0_i32_0 : i32, i32
  }
  func.func @transform_2(%arg0: i32, %arg1: i32) -> (i32, i32, i32) {
    %c0_i32 = arith.constant 0 : i32
    %c0_i32_0 = arith.constant 0 : i32
    %c0_i32_1 = arith.constant 0 : i32
    return %arg0, %c0_i32, %c0_i32_0 : i32, i32, i32
  }
}

</mosaic_0001>

<llo_original>
// kernel: tpu_custom_call.1
$region0: #{tpu_custom_call.1}
  #allocation0 [shape = 'u32[]', space=smem, size = 0x4, offset = 0x4, fixed_abs, tag = 'smem constant byte address 0x4 - core index']
  #allocation1 [shape = 'u32[144,128]{1,0:T(1,128)}', space=vmem, size = 0x12000, scoped, tag = 'internal scratch']
  #allocation2 [shape = 'f32[16,1]{1,0:T(8,128)}', space=vmem, size = 0x2000, scoped, tag = 'scratch operand']
  %s0 = inlined_call_operand.hbm [shape: f32[16,32], index: 0, kind: input, shape index: {}]
  %s1 = inlined_call_operand.hbm [shape: f32[16,32], index: 1, kind: input, shape index: {}]
  %s2 = inlined_call_operand.hbm [shape: f32[1,8,128], index: 2, kind: output, shape index: {}]
  %s3 = sld [smem:[#allocation0]]
  $region34: #{tpu_custom_call.1} parent=0
    _
  %s5 = ssub.s32 1, %s3
  %s6 = scalar_select 0, %s5, %s3
  $region1: #{tpu_custom_call.1} parent=0
    #allocation3 [shape = 'u8[8192]{0}', space=vmem, size = 0x2000, scoped, tag = 'input window, operand 0, single buffered']
    #allocation4 [shape = 's32[1]{0}', space=sflag, size = 0x4, scoped, tag = 'scoped memory for tpu_custom_call.1']
    #allocation5 [shape = 's32[1]{0}', space=sflag, size = 0x4, scoped, tag = 'scoped memory for tpu_custom_call.1']
    #allocation6 [shape = 'u8[8192]{0}', space=vmem, size = 0x2000, scoped, tag = 'input window, operand 1, single buffered']
    #allocation7 [shape = 's32[1]{0}', space=sflag, size = 0x4, scoped, tag = 'scoped memory for tpu_custom_call.1']
    #allocation8 [shape = 'u8[4096]{0}', space=vmem, size = 0x1000, scoped, tag = 'output window, operand 0, single buffered']
    %7 = vsyncpa [#allocation4], 0
    %8 = vsyncpa [#allocation7], 0
    %9 = vsyncpa [#allocation5], 0
    // Predicated region
    $region2: #{tpu_custom_call.1} parent=1 // pred_check
      _
    $region3: #{tpu_custom_call.1} parent=1 // pred_check_branch
      %11 = sbr.rel (0) target = $region5
    $region4: #{tpu_custom_call.1} parent=1 // pred_region
      %s12 = sadd.s32 0, 0
      %p13 = scmp.lt.s32.totalorder %s12, 0
      %s14 = scalar_select %p13, %s12, 0
      %s15 = smul.u32 2, %s14
      %s17 = ssub.s32 256, 256
      %18 = vsyncadd [#allocation4], %s17
      %s19 = smul.addr %s15, 128
      %s20 = scalar_lea.hbm %s0, %s19
      %s21 = sshll.u32 [#allocation3], 4
      %s22 = int_to_ptr.vmem [resolvable:$true] %s21
      %27 = dma.hbm_to_vmem [thread:$0]  %s20, 256, %s22, [#allocation4], 128, 128, 8
    $region5: #{tpu_custom_call.1} parent=1 // pred_fallthru
      _
    // Predicated region
    $region6: #{tpu_custom_call.1} parent=1 // pred_check
      _
    $region7: #{tpu_custom_call.1} parent=1 // pred_check_branch
      %29 = sbr.rel (0) target = $region9
    $region8: #{tpu_custom_call.1} parent=1 // pred_region
      %s30 = sadd.s32 0, 0
      %p31 = scmp.lt.s32.totalorder %s30, 0
      %s32 = scalar_select %p31, %s30, 0
      %s33 = smul.u32 2, %s32
      %s35 = ssub.s32 256, 256
      %36 = vsyncadd [#allocation7], %s35
      %s37 = smul.addr %s33, 128
      %s38 = scalar_lea.hbm %s1, %s37
      %s39 = sshll.u32 [#allocation6], 4
      %s40 = int_to_ptr.vmem [resolvable:$true] %s39
      %45 = dma.hbm_to_vmem [thread:$0]  %s38, 256, %s40, [#allocation7], 128, 128, 8
    $region9: #{tpu_custom_call.1} parent=1 // pred_fallthru
      _
    // Predicated region
    $region10: #{tpu_custom_call.1} parent=1 // pred_check
      _
    $region11: #{tpu_custom_call.1} parent=1 // pred_check_branch
      %47 = sbr.rel (0) target = $region13
    $region12: #{tpu_custom_call.1} parent=1 // pred_region
      %48 = dma.done [#allocation4], 256
    $region13: #{tpu_custom_call.1} parent=1 // pred_fallthru
      _
    // Predicated region
    $region14: #{tpu_custom_call.1} parent=1 // pred_check
      _
    $region15: #{tpu_custom_call.1} parent=1 // pred_check_branch
      %50 = sbr.rel (0) target = $region17
    $region16: #{tpu_custom_call.1} parent=1 // pred_region
      %51 = dma.done [#allocation7], 256
    $region17: #{tpu_custom_call.1} parent=1 // pred_fallthru
      _
    %s52 = sadd.s32 0, 0
    %p53 = scmp.lt.s32.totalorder %s52, 0
    %s54 = scalar_select %p53, %s52, 0
    %s55 = smul.u32 2, %s54
    %s56 = sadd.s32 0, 0
    %p57 = scmp.lt.s32.totalorder %s56, 0
    %s58 = scalar_select %p57, %s56, 0
    %s59 = smul.u32 2, %s58
    %p60 = scmp.eq.s32.totalorder 0, 0
    // Predicated region
    $region18: #{tpu_custom_call.1} parent=1 // pred_check
      %p61 = pneg %p60
    $region19: #{tpu_custom_call.1} parent=1 // pred_check_branch
      %63 = sbr.rel (%p61) target = $region21
    $region20: #{tpu_custom_call.1} parent=1 // pred_region
      %vm64 = vcmask 7168
      %65 = vst.msk [vmem:[#allocation2] sm:$0xff] %vm64, 0.0
      %66 = vst.msk [vmem:[#allocation2 + $0x8] sm:$0xff] %vm64, 0.0
    $region21: #{tpu_custom_call.1} parent=1 // pred_fallthru
      _
    %s67 = sadd.s32 0, 0
    %s68 = smul.u32 %s67, 16
    %v69 = vlaneseq
    %v70 = vshrl.u32 %v69, 7
    %v71 = vadd.s32 %v70, 8
    %v72 = vstv %s68
    %v73 = vadd.s32 %v70, %v72
    %v74 = vadd.s32 %v71, %v72
    %vm75 = vcmp.lt.s32.totalorder %v73, 16
    %vm76 = vcmp.lt.s32.totalorder %v74, 16
    %v77 = vld [vmem:[#allocation3] sm:$0xff]
    %v78 = vld [vmem:[#allocation3 + $0x8] sm:$0xff]
    %v79 = vsel %vm75, 1, 0
    %v80 = vsel %vm76, 1, 0
    %vm81 = vcmp.eq.s32.totalorder %v79, 1
    %vm82 = vcmp.eq.s32.totalorder %v80, 1
    %v83 = vsel %vm81, %v77, 0.0
    %v84 = vsel %vm82, %v78, 0.0
    %v85 = vld [vmem:[#allocation6] sm:$0xff]
    %v86 = vld [vmem:[#allocation6 + $0x8] sm:$0xff]
    %v87 = vsel %vm81, %v85, 0.0
    %v88 = vsel %vm82, %v86, 0.0
    %vm89 = vcmask 261120
    %v90 = vsel %vm89, %v83, -inf
    %91 = vmax.xlane.f32.xlu0 %v90
    %v92 = vpop.xlane.xlu0 %91
    %v93 = vsel %vm89, %v84, -inf
    %94 = vmax.xlane.f32.xlu0 %v93
    %v95 = vpop.xlane.xlu0 %94
    %v96 = vsub.f32 %v83, %v92
    %v97 = vsub.f32 %v84, %v95
    %v98 = vmul.f32 %v96, 1.442695
    %v99 = vpow.pop %v98
    %v100 = vmul.f32 %v97, 1.442695
    %v101 = vpow.pop %v100
    %v102 = vsel %vm89, %v99, 0.0
    %103 = vadd.xlane.f32.xlu0 %v102
    %v104 = vpop.xlane.xlu0 %103
    %v105 = vsel %vm89, %v101, 0.0
    %106 = vadd.xlane.f32.xlu0 %v105
    %v107 = vpop.xlane.xlu0 %106
    %v108 = vlog2.pop %v104
    %v109 = vmul.f32 %v108, 0.6931472
    %v110 = vlog2.pop %v107
    %v111 = vmul.f32 %v110, 0.6931472
    %v112 = vsel %vm89, %v87, 0.0
    %113 = vadd.xlane.f32.xlu0 %v112
    %v114 = vpop.xlane.xlu0 %113
    %v115 = vsel %vm89, %v88, 0.0
    %116 = vadd.xlane.f32.xlu0 %v115
    %v117 = vpop.xlane.xlu0 %116
    %v118 = vmul.f32 %v87, %v83
    %v119 = vmul.f32 %v88, %v84
    %v120 = vsel %vm89, %v118, 0.0
    %121 = vadd.xlane.f32.xlu0 %v120
    %v122 = vpop.xlane.xlu0 %121
    %v123 = vsel %vm89, %v119, 0.0
    %124 = vadd.xlane.f32.xlu0 %v123
    %v125 = vpop.xlane.xlu0 %124
    %v126 = vld [vmem:[#allocation2] sm:$0xff]
    %v127 = vld [vmem:[#allocation2 + $0x8] sm:$0xff]
    %v128 = vadd.f32 %v92, %v109
    %v129 = vadd.f32 %v95, %v111
    %v130 = vmul.f32 %v128, %v114
    %v131 = vmul.f32 %v129, %v117
    %v132 = vsub.f32 %v130, %v122
    %v133 = vsub.f32 %v131, %v125
    %v134 = vadd.f32 %v126, %v132
    %v135 = vadd.f32 %v127, %v133
    %vm136 = vcmask 7168
    %137 = vst.msk [vmem:[#allocation2] sm:$0xff] %vm136, %v134
    %138 = vst.msk [vmem:[#allocation2 + $0x8] sm:$0xff] %vm136, %v135
    // Predicated region
    $region22: #{tpu_custom_call.1} parent=1 // pred_check
      %p139 = pneg %p60
    $region23: #{tpu_custom_call.1} parent=1 // pred_check_branch
      %141 = sbr.rel (%p139) target = $region25
    $region24: #{tpu_custom_call.1} parent=1 // pred_region
      %v142 = vld [vmem:[#allocation2] sm:$0xff]
      %v143 = vld [vmem:[#allocation2 + $0x8] sm:$0xff]
      %v144 = vsel %vm136, %v142, 0.0
      %v145 = vsel %vm136, %v143, 0.0
      %v146 = vadd.f32 %v144, %v145
      %147 = vadd.xlane.f32.xlu0 %v146
      %v148 = vpop.xlane.xlu0 %147
      %v149 = vrot.slane %v148, 4
      %v150 = vadd.f32 %v148, %v149
      %v151 = vrot.slane %v150, 2
      %v152 = vadd.f32 %v150, %v151
      %v153 = vrot.slane %v152, 1
      %v154 = vadd.f32 %v152, %v153
      %s155 = vtos %v154
      %v156 = vstv %s155
      %157 = vst [vmem:[#allocation8] sm:$0xff] %v156
    $region25: #{tpu_custom_call.1} parent=1 // pred_fallthru
      _
    // Predicated region
    $region26: #{tpu_custom_call.1} parent=1 // pred_check
      _
    $region27: #{tpu_custom_call.1} parent=1 // pred_check_branch
      %159 = sbr.rel (0) target = $region29
    $region28: #{tpu_custom_call.1} parent=1 // pred_region
      %s161 = ssub.s32 128, 128
      %162 = vsyncadd [#allocation5], %s161
      %s164 = sshll.u32 [#allocation8], 4
      %s165 = int_to_ptr.vmem [resolvable:$true] %s164
      %167 = dma.vmem_to_hbm [thread:$0]  %s165, 128, %s2, [#allocation5]
    $region29: #{tpu_custom_call.1} parent=1 // pred_fallthru
      _
    // Predicated region
    $region30: #{tpu_custom_call.1} parent=1 // pred_check
      _
    $region31: #{tpu_custom_call.1} parent=1 // pred_check_branch
      %169 = sbr.rel (0) target = $region33
    $region32: #{tpu_custom_call.1} parent=1 // pred_region
      %170 = dma.done [#allocation5], 128
    $region33: #{tpu_custom_call.1} parent=1 // pred_fallthru
      _
    %171 = vsyncpa [#allocation4], 1
    %172 = vsyncpa [#allocation7], 1
    %173 = vsyncpa [#allocation5], 1

</llo_original>
